<compile_context>
chip_gen: v7x
topology: tpu7x:2x2x1
jax: 0.10.0
libtpu: 0.0.40
codegen_flags: <defaults>
</compile_context>

<pallas_src>
import math

import jax
import jax.numpy as jnp
from jax.experimental import pallas as pl
from jax.experimental.pallas import tpu as pltpu

EPS = 1e-5                      # nn.BatchNorm2d default eps
_LANE = 128                     # TPU lane width
_SUBLANE = 8                    # f32 sublane tile
_MAX_BLOCK_BYTES = 4 << 20      # ~4 MiB per data block; with <=3 double-buffered
                                # streams the peak is ~24 MiB (safe on v7x's 64 MiB VMEM)
_MAX_ROW_TILE = 4096
_VMEM_LIMIT_BYTES = 48 << 20    # raise scoped VMEM explicitly (v5e default: 16 MiB)


def _round_up(x: int, m: int) -> int:
    return (x + m - 1) // m * m


def _pick_row_tile(n_rows: int, hw_pad: int) -> int:
    """Row (sublane) tile: as large as the block-byte budget allows so the mem-bound
    kernels run near HBM roofline, while leaving >=2 grid steps when there is enough
    work so the 'parallel' grid axis can shard over v7x's two TensorCores."""
    by_budget = _MAX_BLOCK_BYTES // (hw_pad * 4)
    rt = max(_SUBLANE, min(_MAX_ROW_TILE, by_budget) // _SUBLANE * _SUBLANE)
    rt = min(rt, _round_up(n_rows, _SUBLANE))
    if rt < n_rows < 2 * rt:                    # split into two near-equal tiles
        rt = _round_up((n_rows + 1) // 2, _SUBLANE)
    return rt


def _pad2d(a, rows, cols):
    r, c = a.shape
    if r == rows and c == cols:
        return a
    return jnp.pad(a, ((0, rows - r), (0, cols - c)))


# ---------------------------------------------------------------------------
# Kernel 1: per-row moments (sum, sum of squares) over the lane axis.
# Rows are (n, c) instances; zero padding keeps the sums exact.
# ---------------------------------------------------------------------------
def _moments_kernel(x_ref, sum_ref, sq_ref):
    x = x_ref[...]                                    # (row_tile, hw_pad)
    sum_ref[...] = jnp.sum(x, axis=-1, keepdims=True)
    sq_ref[...] = jnp.sum(x * x, axis=-1, keepdims=True)


def _row_moments(x_pad, row_tile):
    r_pad, hw_pad = x_pad.shape
    grid = (r_pad // row_tile,)
    return pl.pallas_call(
        _moments_kernel,
        out_shape=(jax.ShapeDtypeStruct((r_pad, 1), jnp.float32),
                   jax.ShapeDtypeStruct((r_pad, 1), jnp.float32)),
        grid_spec=pltpu.PrefetchScalarGridSpec(
            num_scalar_prefetch=0,
            grid=grid,
            in_specs=[pl.BlockSpec((row_tile, hw_pad), lambda i: (i, 0))],
            out_specs=[pl.BlockSpec((row_tile, 1), lambda i: (i, 0)),
                       pl.BlockSpec((row_tile, 1), lambda i: (i, 0))],
        ),
        compiler_params=pltpu.CompilerParams(
            dimension_semantics=("parallel",),
            vmem_limit_bytes=_VMEM_LIMIT_BYTES,
        ),
    )(x_pad)


# ---------------------------------------------------------------------------
# Kernel 2: out = x * scale + shift   (+ optional residual add, + optional ReLU)
# scale/shift are per-row columns kept fully VMEM-resident (fetched once) and
# sliced per grid step inside the kernel.
# ---------------------------------------------------------------------------
def _make_apply_kernel(row_tile, fuse_residual, apply_relu):
    def kernel(x_ref, scale_ref, shift_ref, *rest):
        if fuse_residual:
            res_ref, o_ref = rest
        else:
            (o_ref,) = rest
        r0 = pl.multiple_of(pl.program_id(0) * row_tile, _SUBLANE)
        scale = scale_ref[pl.ds(r0, row_tile), :]      # (row_tile, 1)
        shift = shift_ref[pl.ds(r0, row_tile), :]
        y = x_ref[...] * scale + shift                 # folded norm + modulation
        if fuse_residual:
            y = y + res_ref[...]
        if apply_relu:
            y = jnp.maximum(y, 0.0)
        o_ref[...] = y
    return kernel


def _scale_shift_apply(x_pad, scale_col, shift_col, res_pad, apply_relu, row_tile):
    r_pad, hw_pad = x_pad.shape
    grid = (r_pad // row_tile,)
    fuse_residual = res_pad is not None

    data_spec = pl.BlockSpec((row_tile, hw_pad), lambda i: (i, 0))
    resident_col = pl.BlockSpec((r_pad, 1), lambda i: (0, 0))   # loaded once, stays resident

    in_specs = [data_spec, resident_col, resident_col]
    operands = [x_pad, scale_col, shift_col]
    if fuse_residual:
        in_specs.append(data_spec)
        operands.append(res_pad)

    return pl.pallas_call(
        _make_apply_kernel(row_tile, fuse_residual, apply_relu),
        out_shape=jax.ShapeDtypeStruct((r_pad, hw_pad), jnp.float32),
        grid_spec=pltpu.PrefetchScalarGridSpec(
            num_scalar_prefetch=0,
            grid=grid,
            in_specs=in_specs,
            out_specs=data_spec,
        ),
        compiler_params=pltpu.CompilerParams(
            dimension_semantics=("parallel",),
            vmem_limit_bytes=_VMEM_LIMIT_BYTES,
        ),
        input_output_aliases={0: 0},     # normalization is a pure overwrite of x
    )(*operands)


# ---------------------------------------------------------------------------
# Plain-JAX glue: style MLPs, spectral norm (weight reparameterization), conv.
# ---------------------------------------------------------------------------
def _spectral_normalize(w, n_iter=30):
    """torch.nn.utils.spectral_norm weight reparameterization via power iteration."""
    v = jnp.full((w.shape[1],), 1.0 / math.sqrt(w.shape[1]), w.dtype)
    u = None
    for _ in range(n_iter):
        u = w @ v
        u = u / (jnp.linalg.norm(u) + 1e-12)
        v = w.T @ u
        v = v / (jnp.linalg.norm(v) + 1e-12)
    sigma = u @ (w @ v)
    return w / sigma


def _style_mlp(z, w1, b1, w2):
    """Sequential(Linear(z_dim, planes), ReLU(), Linear(planes, planes, bias=False))."""
    return jnp.maximum(z @ w1.T + b1, 0.0) @ w2.T


# TODO(synk): the 3x3 convolutions are delegated to XLA's conv; a dedicated Pallas
# conv kernel is not implemented here.
def _conv3x3(x, w):
    return jax.lax.conv_general_dilated(
        x, w, window_strides=(1, 1), padding=((1, 1), (1, 1)),
        dimension_numbers=("NCHW", "OIHW", "NCHW"))


# ---------------------------------------------------------------------------
# adaptiveInstanceNorm2D.forward: gamma(z) * BatchNorm2d(x, affine=False) + beta(z)
# (optionally fused with the ResBlock's trailing residual add + ReLU).
# ---------------------------------------------------------------------------
def adaptive_instance_norm_2d(x, z, p, *, apply_relu=False, residual=None):
    n, c, h, w = x.shape
    hw = h * w
    rows = n * c

    # Style affine params: tiny MLPs -> plain JAX (no MXU-starved pallas_call,
    # no gamma/beta HBM round trip).
    gamma = _style_mlp(z, p["g_w1"], p["g_b1"], p["g_w2"])        # (N, C)
    beta = _style_mlp(z, p["b_w1"], p["b_b1"], p["b_w2"])         # (N, C)

    # Lane-dense (N*C, H*W) view, padded to (8, 128) multiples.
    hw_pad = _round_up(hw, _LANE)
    row_tile = _pick_row_tile(rows, hw_pad)
    r_pad = _round_up(rows, row_tile)
    x_flat = _pad2d(x.astype(jnp.float32).reshape(rows, hw), r_pad, hw_pad)

    # Pass 1: per-row moments (Pallas); per-channel batch-norm stats (C scalars) in jnp.
    row_sum, row_sq = _row_moments(x_flat, row_tile)
    ch_sum = row_sum[:rows, 0].reshape(n, c).sum(axis=0)
    ch_sq = row_sq[:rows, 0].reshape(n, c).sum(axis=0)
    count = jnp.float32(n * hw)
    mean_c = ch_sum / count
    var_c = ch_sq / count - mean_c * mean_c           # biased variance (BN training mode)
    inv_c = jax.lax.rsqrt(var_c + EPS)

    # Fold mean/var/gamma/beta into per-row scale & shift: out = x*scale + shift.
    scale = gamma * inv_c[None, :]                                 # (N, C)
    shift = beta - scale * mean_c[None, :]                         # (N, C)
    scale_col = _pad2d(scale.astype(jnp.float32).reshape(rows, 1), r_pad, 1)
    shift_col = _pad2d(shift.astype(jnp.float32).reshape(rows, 1), r_pad, 1)

    res_flat = None
    if residual is not None:
        res_flat = _pad2d(residual.astype(jnp.float32).reshape(rows, hw), r_pad, hw_pad)

    out_flat = _scale_shift_apply(x_flat, scale_col, shift_col, res_flat,
                                  apply_relu, row_tile)
    return out_flat[:rows, :hw].reshape(n, c, h, w)


def resblock_generator_forward(x, z, params):
    """ResBlock_generator.forward (ReLU act, norm=True, snorm=False, stride=1,
    in_planes == planes -> identity shortcut)."""
    h = _conv3x3(x, params["conv1_w"])
    h = adaptive_instance_norm_2d(h, z, params["bn1"], apply_relu=True)
    h = _conv3x3(h, params["conv2_w"])
    return adaptive_instance_norm_2d(h, z, params["bn2"], apply_relu=True, residual=x)


# ---------------------------------------------------------------------------
# Pure-JAX reference for validation.
# ---------------------------------------------------------------------------
def _reference_forward(x, z, params):
    def ada_bn(h, pp):
        mean = h.mean(axis=(0, 2, 3), keepdims=True)
        var = h.var(axis=(0, 2, 3), keepdims=True)          # biased, training-mode BN
        hn = (h - mean) / jnp.sqrt(var + EPS)
        g = _style_mlp(z, pp["g_w1"], pp["g_b1"], pp["g_w2"])[:, :, None, None]
        b = _style_mlp(z, pp["b_w1"], pp["b_b1"], pp["b_w2"])[:, :, None, None]
        return g * hn + b

    h = _conv3x3(x, params["conv1_w"])
    h = jnp.maximum(ada_bn(h, params["bn1"]), 0.0)
    h = _conv3x3(h, params["conv2_w"])
    return jnp.maximum(ada_bn(h, params["bn2"]) + x, 0.0)


if __name__ == "__main__":
    N, C, H, W, Z_DIM = 2, 4, 16, 16, 128        # in_planes == planes == 4

    root = jax.random.PRNGKey(0)
    k_conv1, k_conv2, k_bn1, k_bn2, k_x, k_z = jax.random.split(root, 6)

    def conv_init(k, cout, cin):
        bound = 1.0 / math.sqrt(cin * 9)
        return jax.random.uniform(k, (cout, cin, 3, 3), jnp.float32, -bound, bound)

    def linear_init(k, out_f, in_f, bias=True):
        kw, kb = jax.random.split(k)
        bound = 1.0 / math.sqrt(in_f)
        wgt = jax.random.uniform(kw, (out_f, in_f), jnp.float32, -bound, bound)
        if not bias:
            return wgt, None
        return wgt, jax.random.uniform(kb, (out_f,), jnp.float32, -bound, bound)

    def adain_params(k):
        kg1, kg2, kb1, kb2 = jax.random.split(k, 4)
        g_w1, g_b1 = linear_init(kg1, C, Z_DIM)
        g_w2, _ = linear_init(kg2, C, C, bias=False)
        b_w1, b_b1 = linear_init(kb1, C, Z_DIM)
        b_w2, _ = linear_init(kb2, C, C, bias=False)
        # snorm=False branch of the module wraps these Linears in spectral_norm.
        return {"g_w1": _spectral_normalize(g_w1), "g_b1": g_b1,
                "g_w2": _spectral_normalize(g_w2),
                "b_w1": _spectral_normalize(b_w1), "b_b1": b_b1,
                "b_w2": _spectral_normalize(b_w2)}

    params = {
        "conv1_w": conv_init(k_conv1, C, C),
        "conv2_w": conv_init(k_conv2, C, C),
        "bn1": adain_params(k_bn1),
        "bn2": adain_params(k_bn2),
    }

    x = jax.random.normal(k_x, (N, C, H, W), dtype=jnp.float32)
    z = jax.random.normal(k_z, (N, Z_DIM), dtype=jnp.float32)

    fwd = jax.jit(resblock_generator_forward)
    out = jax.block_until_ready(fwd(x, z, params))

    ref = _reference_forward(x, z, params)
    assert out.shape == (N, C, H, W)
    max_err = float(jnp.max(jnp.abs(out - ref)))
    assert jnp.allclose(out, ref, atol=2e-4, rtol=2e-4), (
        f"mismatch vs reference (max abs err {max_err})")

    print("KERNEL_OK")
</pallas_src>

<mosaic_0001>
module attributes {stable_mosaic.version = 11 : i64} {
  func.func @_moments_kernel(%arg0: i32, %arg1: memref<8x256xf32, #tpu.memory_space<vmem>>, %arg2: memref<8x1xf32, #tpu.memory_space<vmem>>, %arg3: memref<8x1xf32, #tpu.memory_space<vmem>>) attributes {dimension_semantics = [#tpu.dimension_semantics<parallel>], iteration_bounds = array<i64: 1>, scalar_prefetch = 0 : i64, scratch_operands = 0 : i64, tpu.core_type = #tpu.core_type<tc>, window_params = [{transform_indices = @transform_0, window_bounds = array<i64: 8, 256>}, {transform_indices = @transform_1, window_bounds = array<i64: 8, 1>}, {transform_indices = @transform_2, window_bounds = array<i64: 8, 1>}]} {
    %c0 = arith.constant 0 : index
    %c0_0 = arith.constant 0 : index
    %0 = vector.load %arg1[%c0, %c0_0] : memref<8x256xf32, #tpu.memory_space<vmem>>, vector<8x256xf32>
    %cst = arith.constant dense<0.000000e+00> : vector<8xf32>
    %1 = vector.multi_reduction <add>, %0, %cst [1] : vector<8x256xf32> to vector<8xf32>
    %2 = vector.shape_cast %1 : vector<8xf32> to vector<8x1xf32>
    %c0_1 = arith.constant 0 : index
    %c0_2 = arith.constant 0 : index
    %3 = vector.load %arg2[%c0_1, %c0_2] : memref<8x1xf32, #tpu.memory_space<vmem>>, vector<8x1xf32>
    tpu.vector_store %arg2[%c0_1, %c0_2], %2 {strides = array<i32>} : memref<8x1xf32, #tpu.memory_space<vmem>>, vector<8x1xf32>,
    %4 = arith.mulf %0, %0 : vector<8x256xf32>
    %cst_3 = arith.constant dense<0.000000e+00> : vector<8xf32>
    %5 = vector.multi_reduction <add>, %4, %cst_3 [1] : vector<8x256xf32> to vector<8xf32>
    %6 = vector.shape_cast %5 : vector<8xf32> to vector<8x1xf32>
    %c0_4 = arith.constant 0 : index
    %c0_5 = arith.constant 0 : index
    %7 = vector.load %arg3[%c0_4, %c0_5] : memref<8x1xf32, #tpu.memory_space<vmem>>, vector<8x1xf32>
    tpu.vector_store %arg3[%c0_4, %c0_5], %6 {strides = array<i32>} : memref<8x1xf32, #tpu.memory_space<vmem>>, vector<8x1xf32>,
    return
  }
  func.func @transform_0(%arg0: i32) -> (i32, i32) {
    %c0_i32 = arith.constant 0 : i32
    %c0_i32_0 = arith.constant 0 : i32
    return %arg0, %c0_i32 : i32, i32
  }
  func.func @transform_1(%arg0: i32) -> (i32, i32) {
    %c0_i32 = arith.constant 0 : i32
    %c0_i32_0 = arith.constant 0 : i32
    return %arg0, %c0_i32 : i32, i32
  }
  func.func @transform_2(%arg0: i32) -> (i32, i32) {
    %c0_i32 = arith.constant 0 : i32
    %c0_i32_0 = arith.constant 0 : i32
    return %arg0, %c0_i32 : i32, i32
  }
}

module attributes {stable_mosaic.version = 11 : i64} {
  func.func @kernel(%arg0: i32, %arg1: memref<8x256xf32, #tpu.memory_space<vmem>>, %arg2: memref<8x1xf32, #tpu.memory_space<vmem>>, %arg3: memref<8x1xf32, #tpu.memory_space<vmem>>, %arg4: memref<8x256xf32, #tpu.memory_space<vmem>>) attributes {dimension_semantics = [#tpu.dimension_semantics<parallel>], iteration_bounds = array<i64: 1>, scalar_prefetch = 0 : i64, scratch_operands = 0 : i64, tpu.core_type = #tpu.core_type<tc>, window_params = [{transform_indices = @transform_0, window_bounds = array<i64: 8, 256>}, {pipeline_mode = #tpu.pipeline_mode<synchronous>, transform_indices = @transform_1, window_bounds = array<i64: 8, 1>}, {pipeline_mode = #tpu.pipeline_mode<synchronous>, transform_indices = @transform_2, window_bounds = array<i64: 8, 1>}, {transform_indices = @transform_3, window_bounds = array<i64: 8, 256>}]} {
    %c8_i32 = arith.constant 8 : i32
    %0 = arith.muli %arg0, %c8_i32 : i32
    %1 = tpu.assume_multiple %0, 8 : i32
    %2 = arith.index_cast %1 : i32 to index
    %c0 = arith.constant 0 : index
    %3 = vector.load %arg2[%2, %c0] : memref<8x1xf32, #tpu.memory_space<vmem>>, vector<8x1xf32>
    %4 = arith.index_cast %1 : i32 to index
    %c0_0 = arith.constant 0 : index
    %5 = vector.load %arg3[%4, %c0_0] : memref<8x1xf32, #tpu.memory_space<vmem>>, vector<8x1xf32>
    %c0_1 = arith.constant 0 : index
    %c0_2 = arith.constant 0 : index
    %6 = vector.load %arg1[%c0_1, %c0_2] : memref<8x256xf32, #tpu.memory_space<vmem>>, vector<8x256xf32>
    %7 = vector.broadcast %3 : vector<8x1xf32> to vector<8x256xf32>
    %8 = arith.mulf %6, %7 : vector<8x256xf32>
    %9 = vector.broadcast %5 : vector<8x1xf32> to vector<8x256xf32>
    %10 = arith.addf %8, %9 : vector<8x256xf32>
    %cst = arith.constant 0.000000e+00 : f32
    %11 = vector.broadcast %cst : f32 to vector<8x256xf32>
    %12 = arith.maximumf %10, %11 : vector<8x256xf32>
    %c0_3 = arith.constant 0 : index
    %c0_4 = arith.constant 0 : index
    %13 = vector.load %arg4[%c0_3, %c0_4] : memref<8x256xf32, #tpu.memory_space<vmem>>, vector<8x256xf32>
    tpu.vector_store %arg4[%c0_3, %c0_4], %12 {strides = array<i32>} : memref<8x256xf32, #tpu.memory_space<vmem>>, vector<8x256xf32>,
    return
  }
  func.func @transform_0(%arg0: i32) -> (i32, i32) {
    %c0_i32 = arith.constant 0 : i32
    %c0_i32_0 = arith.constant 0 : i32
    return %arg0, %c0_i32 : i32, i32
  }
  func.func @transform_1(%arg0: i32) -> (i32, i32) {
    %c0_i32 = arith.constant 0 : i32
    %c0_i32_0 = arith.constant 0 : i32
    %c0_i32_1 = arith.constant 0 : i32
    return %c0_i32, %c0_i32_0 : i32, i32
  }
  func.func @transform_2(%arg0: i32) -> (i32, i32) {
    %c0_i32 = arith.constant 0 : i32
    %c0_i32_0 = arith.constant 0 : i32
    %c0_i32_1 = arith.constant 0 : i32
    return %c0_i32, %c0_i32_0 : i32, i32
  }
  func.func @transform_3(%arg0: i32) -> (i32, i32) {
    %c0_i32 = arith.constant 0 : i32
    %c0_i32_0 = arith.constant 0 : i32
    return %arg0, %c0_i32 : i32, i32
  }
}

module attributes {stable_mosaic.version = 11 : i64} {
  func.func @kernel(%arg0: i32, %arg1: memref<8x256xf32, #tpu.memory_space<vmem>>, %arg2: memref<8x1xf32, #tpu.memory_space<vmem>>, %arg3: memref<8x1xf32, #tpu.memory_space<vmem>>, %arg4: memref<8x256xf32, #tpu.memory_space<vmem>>, %arg5: memref<8x256xf32, #tpu.memory_space<vmem>>) attributes {dimension_semantics = [#tpu.dimension_semantics<parallel>], iteration_bounds = array<i64: 1>, scalar_prefetch = 0 : i64, scratch_operands = 0 : i64, tpu.core_type = #tpu.core_type<tc>, window_params = [{transform_indices = @transform_0, window_bounds = array<i64: 8, 256>}, {pipeline_mode = #tpu.pipeline_mode<synchronous>, transform_indices = @transform_1, window_bounds = array<i64: 8, 1>}, {pipeline_mode = #tpu.pipeline_mode<synchronous>, transform_indices = @transform_2, window_bounds = array<i64: 8, 1>}, {transform_indices = @transform_3, window_bounds = array<i64: 8, 256>}, {transform_indices = @transform_4, window_bounds = array<i64: 8, 256>}]} {
    %c8_i32 = arith.constant 8 : i32
    %0 = arith.muli %arg0, %c8_i32 : i32
    %1 = tpu.assume_multiple %0, 8 : i32
    %2 = arith.index_cast %1 : i32 to index
    %c0 = arith.constant 0 : index
    %3 = vector.load %arg2[%2, %c0] : memref<8x1xf32, #tpu.memory_space<vmem>>, vector<8x1xf32>
    %4 = arith.index_cast %1 : i32 to index
    %c0_0 = arith.constant 0 : index
    %5 = vector.load %arg3[%4, %c0_0] : memref<8x1xf32, #tpu.memory_space<vmem>>, vector<8x1xf32>
    %c0_1 = arith.constant 0 : index
    %c0_2 = arith.constant 0 : index
    %6 = vector.load %arg1[%c0_1, %c0_2] : memref<8x256xf32, #tpu.memory_space<vmem>>, vector<8x256xf32>
    %7 = vector.broadcast %3 : vector<8x1xf32> to vector<8x256xf32>
    %8 = arith.mulf %6, %7 : vector<8x256xf32>
    %9 = vector.broadcast %5 : vector<8x1xf32> to vector<8x256xf32>
    %10 = arith.addf %8, %9 : vector<8x256xf32>
    %c0_3 = arith.constant 0 : index
    %c0_4 = arith.constant 0 : index
    %11 = vector.load %arg4[%c0_3, %c0_4] : memref<8x256xf32, #tpu.memory_space<vmem>>, vector<8x256xf32>
    %12 = arith.addf %10, %11 : vector<8x256xf32>
    %cst = arith.constant 0.000000e+00 : f32
    %13 = vector.broadcast %cst : f32 to vector<8x256xf32>
    %14 = arith.maximumf %12, %13 : vector<8x256xf32>
    %c0_5 = arith.constant 0 : index
    %c0_6 = arith.constant 0 : index
    %15 = vector.load %arg5[%c0_5, %c0_6] : memref<8x256xf32, #tpu.memory_space<vmem>>, vector<8x256xf32>
    tpu.vector_store %arg5[%c0_5, %c0_6], %14 {strides = array<i32>} : memref<8x256xf32, #tpu.memory_space<vmem>>, vector<8x256xf32>,
    return
  }
  func.func @transform_0(%arg0: i32) -> (i32, i32) {
    %c0_i32 = arith.constant 0 : i32
    %c0_i32_0 = arith.constant 0 : i32
    return %arg0, %c0_i32 : i32, i32
  }
  func.func @transform_1(%arg0: i32) -> (i32, i32) {
    %c0_i32 = arith.constant 0 : i32
    %c0_i32_0 = arith.constant 0 : i32
    %c0_i32_1 = arith.constant 0 : i32
    return %c0_i32, %c0_i32_0 : i32, i32
  }
  func.func @transform_2(%arg0: i32) -> (i32, i32) {
    %c0_i32 = arith.constant 0 : i32
    %c0_i32_0 = arith.constant 0 : i32
    %c0_i32_1 = arith.constant 0 : i32
    return %c0_i32, %c0_i32_0 : i32, i32
  }
  func.func @transform_3(%arg0: i32) -> (i32, i32) {
    %c0_i32 = arith.constant 0 : i32
    %c0_i32_0 = arith.constant 0 : i32
    return %arg0, %c0_i32 : i32, i32
  }
  func.func @transform_4(%arg0: i32) -> (i32, i32) {
    %c0_i32 = arith.constant 0 : i32
    %c0_i32_0 = arith.constant 0 : i32
    return %arg0, %c0_i32 : i32, i32
  }
}

</mosaic_0001>

<llo_original>
// kernel: squeeze.4
$region0: #{squeeze.4}
  %s0 = inlined_call_operand.vmem [shape: f32[8], index: 0, kind: input, shape index: {}]
  %s1 = inlined_call_operand.vmem [shape: f32[2,4], index: 1, kind: output, shape index: {}]
  $region1: #{squeeze.4} parent=0
    #allocation0 [shape = 'u8[4096]{0}', space=vmem, size = 0x1000, scoped, tag = 'scoped mem for output reshape']
    #allocation1 [shape = 'u8[4096]{0}', space=vmem, size = 0x1000, scoped, tag = 'scoped mem for input reshape']
    %s3 = sshllo.u32 0, 1
    %v4 = vld [vmem:[%s0] sm:%s3]
    %5 = vst [vmem:[#allocation1] sm:%s3] %v4
    %v6 = vld [vmem:[#allocation1] sm:$0x1]
    %vm7 = vcmask 31744
    %8 = vst.msk [vmem:[#allocation0] sm:$0x1] %vm7, %v6
    %v9 = vld [vmem:[#allocation1] sm:$0x1]
    %10 = vrot.lane.b32.xlu0 %v9, 124
    %v11 = vpop.permute.xlu0 %10
    %vm12 = vcmask 31744
    %s13 = scalar_lea.vmem [#allocation0], 1
    %14 = vst.msk [vmem:[%s13] sm:$0x1] %vm12, %v11
    %s16 = sshllo.u32 0, 2
    %v18 = vld [vmem:[#allocation0] sm:%s16]
    %s19 = sshllo.u32 0, 2
    %20 = vst [vmem:[%s1] sm:%s19] %v18

// kernel: resblock_generator_forward.4
$region0: #{resblock_generator_forward.4}
  #allocation0 [shape = 'u32[]', space=smem, size = 0x4, offset = 0x4, fixed_abs, tag = 'smem constant byte address 0x4 - core index']
  #allocation1 [shape = 'u32[144,128]{1,0:T(1,128)}', space=vmem, size = 0x12000, scoped, tag = 'internal scratch']
  %s0 = inlined_call_operand.vmem [shape: f32[8,256], index: 0, kind: input, shape index: {}]
  %s1 = inlined_call_operand.vmem [shape: f32[8,1], index: 1, kind: output, shape index: {0}]
  %s2 = inlined_call_operand.vmem [shape: f32[8,1], index: 2, kind: output, shape index: {1}]
  %3 = xla_tuple %s1, %s2
  %s4 = sld [smem:[#allocation0]]
  $region22: #{resblock_generator_forward.4} parent=0
    _
  %s6 = ssub.s32 1, %s4
  %s7 = scalar_select 0, %s6, %s4
  // Predicated region
  $region2: #{resblock_generator_forward.4} parent=0 // pred_check
    _
  $region3: #{resblock_generator_forward.4} parent=0 // pred_check_branch
    %9 = sbr.rel (0) target = $region5
  $region4: #{resblock_generator_forward.4} parent=0 // pred_region
    _
  $region5: #{resblock_generator_forward.4} parent=0 // pred_fallthru
    _
  %v10 = vld [vmem:[%s0] sm:$0xff]
  %v11 = vld [vmem:[%s0 + $0x8] sm:$0xff]
  %v12 = vadd.f32 %v10, %v11
  %13 = vadd.xlane.f32.xlu0 %v12
  %v14 = vpop.xlane.xlu0 %13
  %vm15 = vcmask 7168
  %16 = vst.msk [vmem:[%s1] sm:$0xff] %vm15, %v14
  %v17 = vmul.f32 %v10, %v10
  %v18 = vmul.f32 %v11, %v11
  %v19 = vadd.f32 %v17, %v18
  %20 = vadd.xlane.f32.xlu0 %v19
  %v21 = vpop.xlane.xlu0 %20
  %22 = vst.msk [vmem:[%s2] sm:$0xff] %vm15, %v21
  // Predicated region
  $region6: #{resblock_generator_forward.4} parent=0 // pred_check
    _
  $region7: #{resblock_generator_forward.4} parent=0 // pred_check_branch
    %24 = sbr.rel (0) target = $region9
  $region8: #{resblock_generator_forward.4} parent=0 // pred_region
    _
  $region9: #{resblock_generator_forward.4} parent=0 // pred_fallthru
    _
  // Predicated region
  $region10: #{resblock_generator_forward.4} parent=0 // pred_check
    _
  $region11: #{resblock_generator_forward.4} parent=0 // pred_check_branch
    %26 = sbr.rel (0) target = $region13
  $region12: #{resblock_generator_forward.4} parent=0 // pred_region
    _
  $region13: #{resblock_generator_forward.4} parent=0 // pred_fallthru
    _
  // Predicated region
  $region14: #{resblock_generator_forward.4} parent=0 // pred_check
    _
  $region15: #{resblock_generator_forward.4} parent=0 // pred_check_branch
    %28 = sbr.rel (0) target = $region17
  $region16: #{resblock_generator_forward.4} parent=0 // pred_region
    _
  $region17: #{resblock_generator_forward.4} parent=0 // pred_fallthru
    _
  // Predicated region
  $region18: #{resblock_generator_forward.4} parent=0 // pred_check
    _
  $region19: #{resblock_generator_forward.4} parent=0 // pred_check_branch
    %30 = sbr.rel (0) target = $region21
  $region20: #{resblock_generator_forward.4} parent=0 // pred_region
    _
  $region21: #{resblock_generator_forward.4} parent=0 // pred_fallthru
    _

// kernel: resblock_generator_forward.5
$region0: #{resblock_generator_forward.5}
  #allocation0 [shape = 'u32[]', space=smem, size = 0x4, offset = 0x4, fixed_abs, tag = 'smem constant byte address 0x4 - core index']
  #allocation1 [shape = 'u32[144,128]{1,0:T(1,128)}', space=vmem, size = 0x12000, scoped, tag = 'internal scratch']
  %s0 = inlined_call_operand.vmem [shape: f32[8,256], index: 0, kind: input, shape index: {}, may-alias: {0,3}]
  %s1 = inlined_call_operand.vmem [shape: f32[8,1], index: 1, kind: input, shape index: {}]
  %s2 = inlined_call_operand.vmem [shape: f32[8,1], index: 2, kind: input, shape index: {}]
  %s3 = inlined_call_operand.vmem [shape: f32[8,256], index: 3, kind: output, shape index: {}, may-alias: {0,3}]
  %s4 = sld [smem:[#allocation0]]
  $region22: #{resblock_generator_forward.5} parent=0
    _
  %s6 = ssub.s32 1, %s4
  %s7 = scalar_select 0, %s6, %s4
  // Predicated region
  $region2: #{resblock_generator_forward.5} parent=0 // pred_check
    _
  $region3: #{resblock_generator_forward.5} parent=0 // pred_check_branch
    %9 = sbr.rel (0) target = $region5
  $region4: #{resblock_generator_forward.5} parent=0 // pred_region
    _
  $region5: #{resblock_generator_forward.5} parent=0 // pred_fallthru
    _
  // Predicated region
  $region6: #{resblock_generator_forward.5} parent=0 // pred_check
    _
  $region7: #{resblock_generator_forward.5} parent=0 // pred_check_branch
    %11 = sbr.rel (0) target = $region9
  $region8: #{resblock_generator_forward.5} parent=0 // pred_region
    _
  $region9: #{resblock_generator_forward.5} parent=0 // pred_fallthru
    _
  // Predicated region
  $region10: #{resblock_generator_forward.5} parent=0 // pred_check
    _
  $region11: #{resblock_generator_forward.5} parent=0 // pred_check_branch
    %13 = sbr.rel (0) target = $region13
  $region12: #{resblock_generator_forward.5} parent=0 // pred_region
    _
  $region13: #{resblock_generator_forward.5} parent=0 // pred_fallthru
    _
  %s14 = smul.u32 0, 8
  %s15 = scalar_lea.vmem %s1, %s14
  %v16 = vld [vmem:[%s15] sm:$0xff]
  %s17 = scalar_lea.vmem %s2, %s14
  %v18 = vld [vmem:[%s17] sm:$0xff]
  %v19 = vld [vmem:[%s0] sm:$0xff]
  %v20 = vld [vmem:[%s0 + $0x8] sm:$0xff]
  %22 = vset.pattern.permute.xlu0 0
  %23 = vperm.xlu0 %22, %v16
  %v24 = vpop.permute.xlu0 %23
  %v26 = vmul.f32 %v19, %v24
  %v27 = vmul.f32 %v20, %v24
  %29 = vset.pattern.permute.xlu0 0
  %30 = vperm.xlu0 %29, %v18
  %v31 = vpop.permute.xlu0 %30
  %v33 = vadd.f32 %v26, %v31
  %v34 = vadd.f32 %v27, %v31
  %v35 = vmax.f32 %v33, 0.0
  %v36 = vmax.f32 %v34, 0.0
  %37 = vst [vmem:[%s3] sm:$0xff] %v35
  %38 = vst [vmem:[%s3 + $0x8] sm:$0xff] %v36
  // Predicated region
  $region14: #{resblock_generator_forward.5} parent=0 // pred_check
    _
  $region15: #{resblock_generator_forward.5} parent=0 // pred_check_branch
    %40 = sbr.rel (0) target = $region17
  $region16: #{resblock_generator_forward.5} parent=0 // pred_region
    _
  $region17: #{resblock_generator_forward.5} parent=0 // pred_fallthru
    _
  // Predicated region
  $region18: #{resblock_generator_forward.5} parent=0 // pred_check
    _
  $region19: #{resblock_generator_forward.5} parent=0 // pred_check_branch
    %42 = sbr.rel (0) target = $region21
  $region20: #{resblock_generator_forward.5} parent=0 // pred_region
    _
  $region21: #{resblock_generator_forward.5} parent=0 // pred_fallthru
    _

// kernel: resblock_generator_forward.7
$region0: #{resblock_generator_forward.7}
  #allocation0 [shape = 'u32[]', space=smem, size = 0x4, offset = 0x4, fixed_abs, tag = 'smem constant byte address 0x4 - core index']
  #allocation1 [shape = 'u32[144,128]{1,0:T(1,128)}', space=vmem, size = 0x12000, scoped, tag = 'internal scratch']
  %s0 = inlined_call_operand.vmem [shape: f32[8,256], index: 0, kind: input, shape index: {}, may-alias: {0,4}]
  %s1 = inlined_call_operand.vmem [shape: f32[8,1], index: 1, kind: input, shape index: {}]
  %s2 = inlined_call_operand.vmem [shape: f32[8,1], index: 2, kind: input, shape index: {}]
  %s3 = inlined_call_operand.vmem [shape: f32[8,256], index: 3, kind: input, shape index: {}]
  %s4 = inlined_call_operand.vmem [shape: f32[8,256], index: 4, kind: output, shape index: {}, may-alias: {0,4}]
  %s5 = sld [smem:[#allocation0]]
  $region26: #{resblock_generator_forward.7} parent=0
    _
  %s7 = ssub.s32 1, %s5
  %s8 = scalar_select 0, %s7, %s5
  // Predicated region
  $region2: #{resblock_generator_forward.7} parent=0 // pred_check
    _
  $region3: #{resblock_generator_forward.7} parent=0 // pred_check_branch
    %10 = sbr.rel (0) target = $region5
  $region4: #{resblock_generator_forward.7} parent=0 // pred_region
    _
  $region5: #{resblock_generator_forward.7} parent=0 // pred_fallthru
    _
  // Predicated region
  $region6: #{resblock_generator_forward.7} parent=0 // pred_check
    _
  $region7: #{resblock_generator_forward.7} parent=0 // pred_check_branch
    %12 = sbr.rel (0) target = $region9
  $region8: #{resblock_generator_forward.7} parent=0 // pred_region
    _
  $region9: #{resblock_generator_forward.7} parent=0 // pred_fallthru
    _
  // Predicated region
  $region10: #{resblock_generator_forward.7} parent=0 // pred_check
    _
  $region11: #{resblock_generator_forward.7} parent=0 // pred_check_branch
    %14 = sbr.rel (0) target = $region13
  $region12: #{resblock_generator_forward.7} parent=0 // pred_region
    _
  $region13: #{resblock_generator_forward.7} parent=0 // pred_fallthru
    _
  // Predicated region
  $region14: #{resblock_generator_forward.7} parent=0 // pred_check
    _
  $region15: #{resblock_generator_forward.7} parent=0 // pred_check_branch
    %16 = sbr.rel (0) target = $region17
  $region16: #{resblock_generator_forward.7} parent=0 // pred_region
    _
  $region17: #{resblock_generator_forward.7} parent=0 // pred_fallthru
    _
  %s17 = smul.u32 0, 8
  %s18 = scalar_lea.vmem %s1, %s17
  %v19 = vld [vmem:[%s18] sm:$0xff]
  %s20 = scalar_lea.vmem %s2, %s17
  %v21 = vld [vmem:[%s20] sm:$0xff]
  %v22 = vld [vmem:[%s0] sm:$0xff]
  %v23 = vld [vmem:[%s0 + $0x8] sm:$0xff]
  %25 = vset.pattern.permute.xlu0 0
  %26 = vperm.xlu0 %25, %v19
  %v27 = vpop.permute.xlu0 %26
  %v29 = vmul.f32 %v22, %v27
  %v30 = vmul.f32 %v23, %v27
  %32 = vset.pattern.permute.xlu0 0
  %33 = vperm.xlu0 %32, %v21
  %v34 = vpop.permute.xlu0 %33
  %v36 = vadd.f32 %v29, %v34
  %v37 = vadd.f32 %v30, %v34
  %v38 = vld [vmem:[%s3] sm:$0xff]
  %v39 = vld [vmem:[%s3 + $0x8] sm:$0xff]
  %v40 = vadd.f32 %v36, %v38
  %v41 = vadd.f32 %v37, %v39
  %v42 = vmax.f32 %v40, 0.0
  %v43 = vmax.f32 %v41, 0.0
  %44 = vst [vmem:[%s4] sm:$0xff] %v42
  %45 = vst [vmem:[%s4 + $0x8] sm:$0xff] %v43
  // Predicated region
  $region18: #{resblock_generator_forward.7} parent=0 // pred_check
    _
  $region19: #{resblock_generator_forward.7} parent=0 // pred_check_branch
    %47 = sbr.rel (0) target = $region21
  $region20: #{resblock_generator_forward.7} parent=0 // pred_region
    _
  $region21: #{resblock_generator_forward.7} parent=0 // pred_fallthru
    _
  // Predicated region
  $region22: #{resblock_generator_forward.7} parent=0 // pred_check
    _
  $region23: #{resblock_generator_forward.7} parent=0 // pred_check_branch
    %49 = sbr.rel (0) target = $region25
  $region24: #{resblock_generator_forward.7} parent=0 // pred_region
    _
  $region25: #{resblock_generator_forward.7} parent=0 // pred_fallthru
    _

</llo_original>
